<compile_context>
chip_gen: v5e
topology: v5e:2x2
jax: 0.10.0
libtpu: 0.0.40
codegen_flags: <defaults>
</compile_context>

<pallas_src>
import functools

import jax
import jax.numpy as jnp
from jax import lax
from jax.experimental import pallas as pl
from jax.experimental.pallas import tpu as pltpu


def _patch_expand_kernel(x_ref, w_ref, sd_ref, sg_ref, beta_ref, o_ref, *, fused):
    """Linear(C -> 2C, no bias) + per-chunk LayerNorm (+ pixel-shuffle layout).

    x_ref    : (bm, C)   input rows (bm = th*W on the fused path)
    w_ref    : (C, 2C)   expand weight, pre-transposed (y = x @ w)
    sd_ref   : (2C, 4)   exact 0/1 chunk-membership matrix ("down")
    sg_ref   : (4, 2C)   chunk membership with gamma folded in ("up")
    beta_ref : (1, 2C)   beta tiled to the 4 chunks
    o_ref    : fused  -> (th, 2, W, C)  pixel-shuffled output block
               unfused-> (bm, 2C)
    """
    y = jnp.dot(x_ref[...], w_ref[...], preferred_element_type=jnp.float32)  # (bm, 2C) f32

    # Per-chunk sums via small matmuls (MXU, default precision; sd is exact 0/1,
    # so no precision is lost on the membership operand).
    sd = sd_ref[...]
    sum_c = jnp.dot(y, sd, preferred_element_type=jnp.float32)        # (bm, 4)
    sum2_c = jnp.dot(y * y, sd, preferred_element_type=jnp.float32)   # (bm, 4)
    inv_s = 4.0 / float(sd_ref.shape[0])                              # = 1/S
    mean_c = sum_c * inv_s
    var_c = sum2_c * inv_s - mean_c * mean_c                          # one-pass variance
    rstd_c = lax.rsqrt(var_c + 1e-5)                                  # EUP work: bm*4 only

    # Broadcast chunk stats to full width with gamma folded in (tiny K=4 dots):
    #   scale = rstd*gamma, shift = mean*rstd*gamma
    sg = sg_ref[...]
    scale = jnp.dot(rstd_c, sg, preferred_element_type=jnp.float32)           # (bm, 2C)
    shift = jnp.dot(mean_c * rstd_c, sg, preferred_element_type=jnp.float32)  # (bm, 2C)
    out = (y * scale - shift + beta_ref[...]).astype(o_ref.dtype)

    if fused:
        th, _, w_cols, half = o_ref.shape          # half == C == 2 * (C//2)
        out3 = out.reshape(th, w_cols, 2 * half)   # free relayout: w_cols % 8 == 0 here
        o_ref[:, 0, :, :] = out3[:, :, :half]      # p1 = 0  -> chunks (p2=0, p2=1)
        o_ref[:, 1, :, :] = out3[:, :, half:]      # p1 = 1  -> chunks (p2=0, p2=1)
    else:
        o_ref[...] = out                           # single lane-dense full-tile store


def _largest_divisor_leq(n, cap):
    cap = max(1, min(int(n), int(cap)))
    for d in range(cap, 0, -1):
        if n % d == 0:
            return d
    return 1


def patch_expand(x, w_expand, gamma, beta, input_resolution, *,
                 target_block_rows=1024, use_bf16_matmul=False):
    """x: (B, H*W, C). w_expand: (2C, C) (nn.Linear weight, out x in).
    gamma/beta: (C//2,). Returns (B, 4*H*W, C//2)."""
    B, L, C = x.shape
    H, W = input_resolution
    assert L == H * W, "input feature has wrong size"
    assert C % 2 == 0
    S = C // 2                      # LayerNorm feature width
    C2 = 2 * C                      # expanded width = 4 * S
    M = B * L                       # total patches
    R = B * H                       # total image rows
    out_dtype = x.dtype

    # bf16 matmul operands are worthwhile on every generation (the MXU is bf16
    # native and bf16 halves the input DMA bytes); LN stats stay f32.
    mm_dtype = jnp.bfloat16 if use_bf16_matmul else x.dtype
    x2 = x.reshape(M, C).astype(mm_dtype)
    wT = jnp.asarray(w_expand).T.astype(mm_dtype)                     # (C, 2C): y = x @ W.T

    # Chunk-membership matrices (exact 0/1); gamma folded into the up matrix,
    # beta tiled once host-side (hoisted broadcasts).
    chunk_of_col = jnp.arange(C2, dtype=jnp.int32) // S
    cid = jnp.arange(4, dtype=jnp.int32)
    sd = (chunk_of_col[:, None] == cid[None, :]).astype(jnp.float32)  # (2C, 4)
    gamma_t = jnp.tile(gamma.astype(jnp.float32), 4)                  # (2C,)
    sg = (sd.T * gamma_t[None, :]).astype(jnp.float32)                # (4, 2C)
    beta_t = jnp.tile(beta.astype(jnp.float32), 4).reshape(1, C2)     # (1, 2C)

    # ---- VMEM budget: 75% of physical capacity (v7x-safe), tile sizing
    #      includes double-buffered x/out tiles and the f32 intermediates. ----
    try:
        vmem_cap = int(pltpu.get_tpu_info().vmem_capacity_bytes)
    except Exception:
        vmem_cap = 64 * 1024 * 1024
    vmem_limit = max(32 * 1024 * 1024, min((vmem_cap * 3) // 4, 96 * 1024 * 1024))

    in_sz = jnp.dtype(mm_dtype).itemsize
    out_sz = jnp.dtype(out_dtype).itemsize
    w_sz = in_sz
    bytes_per_row = 2 * C * in_sz + 2 * C2 * out_sz + 3 * C2 * 4      # x, out, f32 temps
    fixed_bytes = 2 * C * C2 * w_sz + 16 * C2 + (1 << 20)             # weight + constants
    budget = vmem_limit // 2
    row_cap = max(8, (budget - fixed_bytes) // bytes_per_row)
    row_target = int(min(target_block_rows, row_cap, M))

    cost = pl.CostEstimate(
        flops=2 * M * C * C2 + 16 * M * C2,          # main matmul + 4 stat matmuls
        transcendentals=4 * M,                       # rsqrt at chunk width
        bytes_accessed=M * C * in_sz + C * C2 * w_sz + M * C2 * out_sz,
    )
    cparams = pltpu.CompilerParams(dimension_semantics=("parallel",),
                                   vmem_limit_bytes=int(vmem_limit))

    small_specs = [
        pl.BlockSpec((C, C2), lambda i: (0, 0)),     # weight (grid-invariant)
        pl.BlockSpec((C2, 4), lambda i: (0, 0)),     # sd
        pl.BlockSpec((4, C2), lambda i: (0, 0)),     # sg (gamma folded)
        pl.BlockSpec((1, C2), lambda i: (0, 0)),     # beta
    ]

    if W % 8 == 0:
        # ---- Fused pixel shuffle: kernel writes (R, p1, W, p2*S+s) directly,
        #      so the post-kernel reshape is view-only (no extra HBM pass). ----
        th_cap = max(1, row_target // W)
        th_cap = min(th_cap, max(1, R // 2))         # >= 2 grid steps for megacore
        th = _largest_divisor_leq(R, th_cap)         # no row padding, no output slice
        bm = th * W
        grid = (R // th,)

        y4 = pl.pallas_call(
            functools.partial(_patch_expand_kernel, fused=True),
            out_shape=jax.ShapeDtypeStruct((R, 2, W, C), out_dtype),
            grid_spec=pltpu.PrefetchScalarGridSpec(
                num_scalar_prefetch=0,
                grid=grid,
                in_specs=[pl.BlockSpec((bm, C), lambda i: (i, 0))] + small_specs,
                out_specs=pl.BlockSpec((th, 2, W, C), lambda i: (i, 0, 0, 0)),
            ),
            compiler_params=cparams,
            cost_estimate=cost,
        )(x2, wT, sd, sg, beta_t)
        # (R, 2, W, C) == (B, H, p1, W, p2, S): view-only reshape to the result.
        return y4.reshape(B, 4 * L, S)

    # TODO(synk): for W % 8 != 0 the in-kernel (bm, 2C) -> (th, W, .) split is a
    # sublane relayout Mosaic may not lower cheaply; fall back to a lane-dense
    # (bm, 2C) store and let XLA do the pixel shuffle (one extra HBM round trip).
    mult = 16 if mm_dtype == jnp.bfloat16 else 8
    bm = max(mult, min(row_target, M))
    if M > 2 * mult and M // bm < 2:
        bm = (M + 1) // 2                            # keep >= 2 grid steps when possible
    bm = ((bm + mult - 1) // mult) * mult
    grid_m = pl.cdiv(M, bm)
    M_pad = grid_m * bm
    x2p = jnp.pad(x2, ((0, M_pad - M), (0, 0))) if M_pad != M else x2

    y2 = pl.pallas_call(
        functools.partial(_patch_expand_kernel, fused=False),
        out_shape=jax.ShapeDtypeStruct((M_pad, C2), out_dtype),
        grid_spec=pltpu.PrefetchScalarGridSpec(
            num_scalar_prefetch=0,
            grid=(grid_m,),
            in_specs=[pl.BlockSpec((bm, C), lambda i: (i, 0))] + small_specs,
            out_specs=pl.BlockSpec((bm, C2), lambda i: (i, 0)),
        ),
        compiler_params=cparams,
        cost_estimate=cost,
    )(x2p, wT, sd, sg, beta_t)
    if M_pad != M:
        y2 = y2[:M]
    # Pixel shuffle 'b h w (p1 p2 c) -> b (h p1) (w p2) c' (XLA, fallback path).
    y2 = y2.reshape(B, H, W, 2, 2, S).transpose(0, 1, 3, 2, 4, 5)
    return y2.reshape(B, 4 * L, S)


def patch_expand_reference(x, w_expand, gamma, beta, input_resolution):
    """Pure-JAX reference mirroring the PyTorch forward exactly."""
    H, W = input_resolution
    B, L, _ = x.shape
    y = x @ w_expand.T                               # Linear(dim, 2*dim, bias=False)
    C = y.shape[-1]
    y = y.reshape(B, H, W, C)
    y = y.reshape(B, H, W, 2, 2, C // 4)
    y = y.transpose(0, 1, 3, 2, 4, 5).reshape(B, 2 * H, 2 * W, C // 4)
    y = y.reshape(B, -1, C // 4)
    mean = y.mean(-1, keepdims=True)
    var = ((y - mean) ** 2).mean(-1, keepdims=True)
    yn = (y - mean) / jnp.sqrt(var + 1e-5)
    return yn * gamma + beta


if __name__ == "__main__":
    key = jax.random.PRNGKey(0)
    kx, kw, kg, kb = jax.random.split(key, 4)

    # Config 1: B=2, 8x8 patches, dim=64 (f32, strict tolerance, fused path).
    B, H, W, dim = 2, 8, 8, 64
    L = H * W
    x = jax.random.normal(kx, (B, L, dim), dtype=jnp.float32)
    w_expand = jax.random.normal(kw, (2 * dim, dim), dtype=jnp.float32) * 0.05
    gamma = 1.0 + 0.1 * jax.random.normal(kg, (dim // 2,), dtype=jnp.float32)
    beta = 0.1 * jax.random.normal(kb, (dim // 2,), dtype=jnp.float32)

    out = jax.block_until_ready(patch_expand(x, w_expand, gamma, beta, (H, W)))
    ref = patch_expand_reference(x, w_expand, gamma, beta, (H, W))
    assert out.shape == (B, 4 * L, dim // 2), out.shape
    assert jnp.allclose(out, ref, atol=1e-4, rtol=1e-4), (
        float(jnp.max(jnp.abs(out - ref))))

    # Config 2: W not a multiple of 8 and rows not divisible by the tile
    # (exercises the padded, unfused fallback path).
    B2, H2, W2, dim2 = 1, 3, 3, 16
    L2 = H2 * W2
    k1, k2, k3, k4 = jax.random.split(jax.random.PRNGKey(1), 4)
    xb = jax.random.normal(k1, (B2, L2, dim2), dtype=jnp.float32)
    wb = jax.random.normal(k2, (2 * dim2, dim2), dtype=jnp.float32) * 0.1
    gb = 1.0 + 0.1 * jax.random.normal(k3, (dim2 // 2,), dtype=jnp.float32)
    bb = 0.1 * jax.random.normal(k4, (dim2 // 2,), dtype=jnp.float32)
    out2 = jax.block_until_ready(patch_expand(xb, wb, gb, bb, (H2, W2)))
    ref2 = patch_expand_reference(xb, wb, gb, bb, (H2, W2))
    assert out2.shape == (B2, 4 * L2, dim2 // 2), out2.shape
    assert jnp.allclose(out2, ref2, atol=1e-4, rtol=1e-4), (
        float(jnp.max(jnp.abs(out2 - ref2))))

    # Config 3: bf16 matmul operands (all generations); LN stays f32, so only
    # the matmul rounding loosens the tolerance.
    out3 = jax.block_until_ready(
        patch_expand(x, w_expand, gamma, beta, (H, W), use_bf16_matmul=True))
    assert out3.shape == (B, 4 * L, dim // 2), out3.shape
    assert jnp.allclose(out3, ref, atol=1e-1, rtol=1e-1), (
        float(jnp.max(jnp.abs(out3 - ref))))

    print("KERNEL_OK")
</pallas_src>

<mosaic_0001>
module attributes {stable_mosaic.version = 11 : i64} {
  func.func @_patch_expand_kernel(%arg0: i32, %arg1: memref<64x64xf32, #tpu.memory_space<vmem>>, %arg2: memref<64x128xf32, #tpu.memory_space<vmem>>, %arg3: memref<128x4xf32, #tpu.memory_space<vmem>>, %arg4: memref<4x128xf32, #tpu.memory_space<vmem>>, %arg5: memref<1x128xf32, #tpu.memory_space<vmem>>, %arg6: memref<8x2x8x64xf32, #tpu.memory_space<vmem>>) attributes {dimension_semantics = [#tpu.dimension_semantics<parallel>], iteration_bounds = array<i64: 2>, scalar_prefetch = 0 : i64, scratch_operands = 0 : i64, tpu.core_type = #tpu.core_type<tc>, window_params = [{transform_indices = @transform_0, window_bounds = array<i64: 64, 64>}, {pipeline_mode = #tpu.pipeline_mode<synchronous>, transform_indices = @transform_1, window_bounds = array<i64: 64, 128>}, {pipeline_mode = #tpu.pipeline_mode<synchronous>, transform_indices = @transform_2, window_bounds = array<i64: 128, 4>}, {pipeline_mode = #tpu.pipeline_mode<synchronous>, transform_indices = @transform_3, window_bounds = array<i64: 4, 128>}, {pipeline_mode = #tpu.pipeline_mode<synchronous>, transform_indices = @transform_4, window_bounds = array<i64: 1, 128>}, {transform_indices = @transform_5, window_bounds = array<i64: 8, 2, 8, 64>}]} {
    %c0 = arith.constant 0 : index
    %c0_0 = arith.constant 0 : index
    %0 = vector.load %arg1[%c0, %c0_0] : memref<64x64xf32, #tpu.memory_space<vmem>>, vector<64x64xf32>
    %c0_1 = arith.constant 0 : index
    %c0_2 = arith.constant 0 : index
    %1 = vector.load %arg2[%c0_1, %c0_2] : memref<64x128xf32, #tpu.memory_space<vmem>>, vector<64x128xf32>
    %cst = arith.constant dense<0.000000e+00> : vector<64x128xf32>
    %2 = tpu.matmul %0, %1, %cst {dimension_numbers = #tpu.dot_dimension_numbers<[1], [0], [0], [1], [0, 0, 1, 1], [], []>} : vector<64x64xf32>, vector<64x128xf32>, vector<64x128xf32> -> vector<64x128xf32>
    %c0_3 = arith.constant 0 : index
    %c0_4 = arith.constant 0 : index
    %3 = vector.load %arg3[%c0_3, %c0_4] : memref<128x4xf32, #tpu.memory_space<vmem>>, vector<128x4xf32>
    %cst_5 = arith.constant dense<0.000000e+00> : vector<64x4xf32>
    %4 = tpu.matmul %2, %3, %cst_5 {dimension_numbers = #tpu.dot_dimension_numbers<[1], [0], [0], [1], [0, 0, 1, 1], [], []>} : vector<64x128xf32>, vector<128x4xf32>, vector<64x4xf32> -> vector<64x4xf32>
    %5 = arith.mulf %2, %2 : vector<64x128xf32>
    %cst_6 = arith.constant dense<0.000000e+00> : vector<64x4xf32>
    %6 = tpu.matmul %5, %3, %cst_6 {dimension_numbers = #tpu.dot_dimension_numbers<[1], [0], [0], [1], [0, 0, 1, 1], [], []>} : vector<64x128xf32>, vector<128x4xf32>, vector<64x4xf32> -> vector<64x4xf32>
    %cst_7 = arith.constant 3.125000e-02 : f32
    %7 = vector.broadcast %cst_7 : f32 to vector<64x4xf32>
    %8 = arith.mulf %4, %7 : vector<64x4xf32>
    %cst_8 = arith.constant 3.125000e-02 : f32
    %9 = vector.broadcast %cst_8 : f32 to vector<64x4xf32>
    %10 = arith.mulf %6, %9 : vector<64x4xf32>
    %11 = arith.mulf %8, %8 : vector<64x4xf32>
    %12 = arith.subf %10, %11 : vector<64x4xf32>
    %cst_9 = arith.constant 9.99999974E-6 : f32
    %13 = vector.broadcast %cst_9 : f32 to vector<64x4xf32>
    %14 = arith.addf %12, %13 : vector<64x4xf32>
    %15 = math.rsqrt %14 : vector<64x4xf32>
    %c0_10 = arith.constant 0 : index
    %c0_11 = arith.constant 0 : index
    %16 = vector.load %arg4[%c0_10, %c0_11] : memref<4x128xf32, #tpu.memory_space<vmem>>, vector<4x128xf32>
    %cst_12 = arith.constant dense<0.000000e+00> : vector<64x128xf32>
    %17 = tpu.matmul %15, %16, %cst_12 {dimension_numbers = #tpu.dot_dimension_numbers<[1], [0], [0], [1], [0, 0, 1, 1], [], []>} : vector<64x4xf32>, vector<4x128xf32>, vector<64x128xf32> -> vector<64x128xf32>
    %18 = arith.mulf %8, %15 : vector<64x4xf32>
    %cst_13 = arith.constant dense<0.000000e+00> : vector<64x128xf32>
    %19 = tpu.matmul %18, %16, %cst_13 {dimension_numbers = #tpu.dot_dimension_numbers<[1], [0], [0], [1], [0, 0, 1, 1], [], []>} : vector<64x4xf32>, vector<4x128xf32>, vector<64x128xf32> -> vector<64x128xf32>
    %20 = arith.mulf %2, %17 : vector<64x128xf32>
    %21 = arith.subf %20, %19 : vector<64x128xf32>
    %c0_14 = arith.constant 0 : index
    %c0_15 = arith.constant 0 : index
    %22 = vector.load %arg5[%c0_14, %c0_15] : memref<1x128xf32, #tpu.memory_space<vmem>>, vector<1x128xf32>
    %23 = vector.broadcast %22 : vector<1x128xf32> to vector<64x128xf32>
    %24 = arith.addf %21, %23 : vector<64x128xf32>
    %25 = vector.shape_cast %24 : vector<64x128xf32> to vector<8x8x128xf32>
    %26 = vector.extract_strided_slice %25 {offsets = [0, 0, 0], sizes = [8, 8, 64], strides = [1, 1, 1]} : vector<8x8x128xf32> to vector<8x8x64xf32>
    %c0_16 = arith.constant 0 : index
    %c0_17 = arith.constant 0 : index
    %c0_18 = arith.constant 0 : index
    %c0_19 = arith.constant 0 : index
    %27 = vector.load %arg6[%c0_16, %c0_17, %c0_18, %c0_19] : memref<8x2x8x64xf32, #tpu.memory_space<vmem>>, vector<8x1x8x64xf32>
    %28 = vector.shape_cast %27 : vector<8x1x8x64xf32> to vector<8x8x64xf32>
    %29 = vector.shape_cast %26 : vector<8x8x64xf32> to vector<8x1x8x64xf32>
    tpu.vector_store %arg6[%c0_16, %c0_17, %c0_18, %c0_19], %29 {strides = array<i32>} : memref<8x2x8x64xf32, #tpu.memory_space<vmem>>, vector<8x1x8x64xf32>,
    %30 = vector.extract_strided_slice %25 {offsets = [0, 0, 64], sizes = [8, 8, 64], strides = [1, 1, 1]} : vector<8x8x128xf32> to vector<8x8x64xf32>
    %c0_20 = arith.constant 0 : index
    %c1 = arith.constant 1 : index
    %c0_21 = arith.constant 0 : index
    %c0_22 = arith.constant 0 : index
    %31 = vector.load %arg6[%c0_20, %c1, %c0_21, %c0_22] : memref<8x2x8x64xf32, #tpu.memory_space<vmem>>, vector<8x1x8x64xf32>
    %32 = vector.shape_cast %31 : vector<8x1x8x64xf32> to vector<8x8x64xf32>
    %33 = vector.shape_cast %30 : vector<8x8x64xf32> to vector<8x1x8x64xf32>
    tpu.vector_store %arg6[%c0_20, %c1, %c0_21, %c0_22], %33 {strides = array<i32>} : memref<8x2x8x64xf32, #tpu.memory_space<vmem>>, vector<8x1x8x64xf32>,
    return
  }
  func.func @transform_0(%arg0: i32) -> (i32, i32) {
    %c0_i32 = arith.constant 0 : i32
    %c0_i32_0 = arith.constant 0 : i32
    return %arg0, %c0_i32 : i32, i32
  }
  func.func @transform_1(%arg0: i32) -> (i32, i32) {
    %c0_i32 = arith.constant 0 : i32
    %c0_i32_0 = arith.constant 0 : i32
    %c0_i32_1 = arith.constant 0 : i32
    return %c0_i32, %c0_i32_0 : i32, i32
  }
  func.func @transform_2(%arg0: i32) -> (i32, i32) {
    %c0_i32 = arith.constant 0 : i32
    %c0_i32_0 = arith.constant 0 : i32
    %c0_i32_1 = arith.constant 0 : i32
    return %c0_i32, %c0_i32_0 : i32, i32
  }
  func.func @transform_3(%arg0: i32) -> (i32, i32) {
    %c0_i32 = arith.constant 0 : i32
    %c0_i32_0 = arith.constant 0 : i32
    %c0_i32_1 = arith.constant 0 : i32
    return %c0_i32, %c0_i32_0 : i32, i32
  }
  func.func @transform_4(%arg0: i32) -> (i32, i32) {
    %c0_i32 = arith.constant 0 : i32
    %c0_i32_0 = arith.constant 0 : i32
    %c0_i32_1 = arith.constant 0 : i32
    return %c0_i32, %c0_i32_0 : i32, i32
  }
  func.func @transform_5(%arg0: i32) -> (i32, i32, i32, i32) {
    %c0_i32 = arith.constant 0 : i32
    %c0_i32_0 = arith.constant 0 : i32
    %c0_i32_1 = arith.constant 0 : i32
    %c0_i32_2 = arith.constant 0 : i32
    return %arg0, %c0_i32, %c0_i32_0, %c0_i32_1 : i32, i32, i32, i32
  }
}

</mosaic_0001>

<llo_original>
// kernel: tpu_custom_call.1
$region0: #{tpu_custom_call.1}
  #allocation0 [shape = 'u32[]', space=smem, size = 0x4, offset = 0x4, fixed_abs, tag = 'smem constant byte address 0x4 - core index']
  #allocation1 [shape = 'u32[72,128]{1,0:T(1,128)}', space=vmem, size = 0x9000, scoped, tag = 'internal scratch']
  %s0 = inlined_call_operand.vmem [shape: f32[128,64], index: 0, kind: input, shape index: {}]
  %s1 = inlined_call_operand.vmem [shape: f32[64,128], index: 1, kind: input, shape index: {}]
  %s2 = inlined_call_operand.vmem [shape: f32[128,4], index: 2, kind: input, shape index: {}]
  %s3 = inlined_call_operand.vmem [shape: f32[4,128], index: 3, kind: input, shape index: {}]
  %s4 = inlined_call_operand.vmem [shape: f32[1,128], index: 4, kind: input, shape index: {}]
  %s5 = inlined_call_operand.hbm [shape: f32[16,2,8,64], index: 5, kind: output, shape index: {}]
  %s6 = sld [smem:[#allocation0]]
  $region53: #{tpu_custom_call.1} parent=0
    _
  %s8 = ssub.s32 1, %s6
  %s9 = scalar_select 0, %s8, %s6
  $region1: #{tpu_custom_call.1} parent=0
    #allocation2 [shape = 'u8[131072]{0}', space=vmem, size = 0x20000, scoped, tag = 'output window, operand 0']
    #allocation3 [shape = 's32[2]{0}', space=sflag, size = 0x8, scoped, tag = 'scoped memory for tpu_custom_call.1']
    %10 = vsyncpa [#allocation3], 0
    %s11 = scalar_lea.sflag [#allocation3], 1
    %12 = vsyncpa %s11, 0
    loop: start=0, step=1, limit=4
    $region2: #{tpu_custom_call.1} parent=1 // loop_pre_header
      _
    $region3: #{tpu_custom_call.1} parent=1 // loop_header
      %s14 = sphi 0, %s18
      %p15 = scmp.ge.s32.totalorder %s14, 4
      %s24 = sphi 0, %s26
      %s27 = sphi 0, %s24
      %s28 = sphi 0, %s27
      %s44 = sphi 0, %s28
      %s48 = sphi 0, %s48
      %s50 = sphi 0, %s48
      %s51 = sphi 0, %s50
      %s65 = sphi 0, %s51
      %s69 = sphi 0, %s69
      %s71 = sphi 0, %s69
      %s72 = sphi 0, %s71
      %s86 = sphi 0, %s72
      %s90 = sphi 0, %s90
      %s92 = sphi 0, %s90
      %s93 = sphi 0, %s92
      %s107 = sphi 0, %s93
      %s111 = sphi 0, %s111
      %s113 = sphi 0, %s111
      %s114 = sphi 0, %s113
      %s128 = sphi 0, %s114
      %s134 = sphi 0, %s136
      %s137 = sphi 0, %s134
      %s138 = sphi 0, %s137
      %s154 = sphi 0, %s138
    $region4: #{tpu_custom_call.1} parent=1 // loop_header_branch
      %17 = sbr.rel (%p15) target = $region8
    $region5: #{tpu_custom_call.1} parent=1 // loop_body
      %s19 = ssub.s32 %s14, 1
      %s20 = ssub.s32 %s14, 2
      %s21 = sadd.s32 %s14, 1
      %s22 = ssub.s32 %s14, %s21
      %p23 = scmp.eq.s32.totalorder %s22, 0
      %s25 = sadd.s32 %s24, 1
      %s26 = scalar_select %p23, %s24, %s25
      %p29 = pneg %p23
      %p30 = scmp.eq.s32.totalorder %s14, 1
      %p31 = por %p29, %p30
      %p32 = scmp.ne.s32.totalorder %s24, %s27
      %p33 = scmp.eq.s32.totalorder %s14, 0
      %p34 = por %p32, %p33
      %p35 = scmp.ne.s32.totalorder %s24, %s27
      %p36 = scmp.eq.s32.totalorder %s19, 1
      %p37 = por %p35, %p36
      %p38 = scmp.ne.s32.totalorder %s27, %s28
      %p39 = scmp.eq.s32.totalorder %s19, 0
      %p40 = por %p38, %p39
      %p41 = scmp.ne.s32.totalorder %s27, %s28
      %p42 = scmp.eq.s32.totalorder %s20, 1
      %p43 = por %p41, %p42
      %p45 = scmp.ne.s32.totalorder %s28, %s44
      %p46 = scmp.eq.s32.totalorder %s20, 0
      %p47 = por %p45, %p46
      %s49 = sadd.s32 %s48, 1
      %p52 = scmp.eq.s32.totalorder %s14, 1
      %p53 = scmp.ne.s32.totalorder %s48, %s50
      %p54 = scmp.eq.s32.totalorder %s14, 0
      %p55 = por %p53, %p54
      %p56 = scmp.ne.s32.totalorder %s48, %s50
      %p57 = scmp.eq.s32.totalorder %s19, 1
      %p58 = por %p56, %p57
      %p59 = scmp.ne.s32.totalorder %s50, %s51
      %p60 = scmp.eq.s32.totalorder %s19, 0
      %p61 = por %p59, %p60
      %p62 = scmp.ne.s32.totalorder %s50, %s51
      %p63 = scmp.eq.s32.totalorder %s20, 1
      %p64 = por %p62, %p63
      %p66 = scmp.ne.s32.totalorder %s51, %s65
      %p67 = scmp.eq.s32.totalorder %s20, 0
      %p68 = por %p66, %p67
      %s70 = sadd.s32 %s69, 1
      %p73 = scmp.eq.s32.totalorder %s14, 1
      %p74 = scmp.ne.s32.totalorder %s69, %s71
      %p75 = scmp.eq.s32.totalorder %s14, 0
      %p76 = por %p74, %p75
      %p77 = scmp.ne.s32.totalorder %s69, %s71
      %p78 = scmp.eq.s32.totalorder %s19, 1
      %p79 = por %p77, %p78
      %p80 = scmp.ne.s32.totalorder %s71, %s72
      %p81 = scmp.eq.s32.totalorder %s19, 0
      %p82 = por %p80, %p81
      %p83 = scmp.ne.s32.totalorder %s71, %s72
      %p84 = scmp.eq.s32.totalorder %s20, 1
      %p85 = por %p83, %p84
      %p87 = scmp.ne.s32.totalorder %s72, %s86
      %p88 = scmp.eq.s32.totalorder %s20, 0
      %p89 = por %p87, %p88
      %s91 = sadd.s32 %s90, 1
      %p94 = scmp.eq.s32.totalorder %s14, 1
      %p95 = scmp.ne.s32.totalorder %s90, %s92
      %p96 = scmp.eq.s32.totalorder %s14, 0
      %p97 = por %p95, %p96
      %p98 = scmp.ne.s32.totalorder %s90, %s92
      %p99 = scmp.eq.s32.totalorder %s19, 1
      %p100 = por %p98, %p99
      %p101 = scmp.ne.s32.totalorder %s92, %s93
      %p102 = scmp.eq.s32.totalorder %s19, 0
      %p103 = por %p101, %p102
      %p104 = scmp.ne.s32.totalorder %s92, %s93
      %p105 = scmp.eq.s32.totalorder %s20, 1
      %p106 = por %p104, %p105
      %p108 = scmp.ne.s32.totalorder %s93, %s107
      %p109 = scmp.eq.s32.totalorder %s20, 0
      %p110 = por %p108, %p109
      %s112 = sadd.s32 %s111, 1
      %p115 = scmp.eq.s32.totalorder %s14, 1
      %p116 = scmp.ne.s32.totalorder %s111, %s113
      %p117 = scmp.eq.s32.totalorder %s14, 0
      %p118 = por %p116, %p117
      %p119 = scmp.ne.s32.totalorder %s111, %s113
      %p120 = scmp.eq.s32.totalorder %s19, 1
      %p121 = por %p119, %p120
      %p122 = scmp.ne.s32.totalorder %s113, %s114
      %p123 = scmp.eq.s32.totalorder %s19, 0
      %p124 = por %p122, %p123
      %p125 = scmp.ne.s32.totalorder %s113, %s114
      %p126 = scmp.eq.s32.totalorder %s20, 1
      %p127 = por %p125, %p126
      %p129 = scmp.ne.s32.totalorder %s114, %s128
      %p130 = scmp.eq.s32.totalorder %s20, 0
      %p131 = por %p129, %p130
      %s132 = ssub.s32 %s14, %s21
      %p133 = scmp.eq.s32.totalorder %s132, 0
      %s135 = sadd.s32 %s134, 1
      %s136 = scalar_select %p133, %s134, %s135
      %p139 = pneg %p133
      %p140 = scmp.eq.s32.totalorder %s14, 1
      %p141 = por %p139, %p140
      %p142 = scmp.ne.s32.totalorder %s134, %s137
      %p143 = scmp.eq.s32.totalorder %s14, 0
      %p144 = por %p142, %p143
      %p145 = scmp.ne.s32.totalorder %s134, %s137
      %p146 = scmp.eq.s32.totalorder %s19, 1
      %p147 = por %p145, %p146
      %p148 = scmp.ne.s32.totalorder %s137, %s138
      %p149 = scmp.eq.s32.totalorder %s19, 0
      %p150 = por %p148, %p149
      %p151 = scmp.ne.s32.totalorder %s137, %s138
      %p152 = scmp.eq.s32.totalorder %s20, 1
      %p153 = por %p151, %p152
      %p155 = scmp.ne.s32.totalorder %s138, %s154
      %p156 = scmp.eq.s32.totalorder %s20, 0
      %p157 = por %p155, %p156
      %p158 = scmp.le.s32.totalorder 1, %s14
      %p159 = scmp.lt.s32.totalorder %s14, 3
      %p160 = pnand %p158, %p159
      %p161 = pneg %p160
      // Predicated region
      $region9: #{tpu_custom_call.1} parent=5 // pred_check
        _
      $region10: #{tpu_custom_call.1} parent=5 // pred_check_branch
        %163 = sbr.rel (%p160) target = $region12
      $region11: #{tpu_custom_call.1} parent=5 // pred_region
        %s164 = ssub.s32 %s14, 1
        // Predicated region
        $region13: #{tpu_custom_call.1} parent=11 // pred_check
          %p165 = pneg %p61
        $region14: #{tpu_custom_call.1} parent=11 // pred_check_branch
          %167 = sbr.rel (%p165) target = $region16
        $region15: #{tpu_custom_call.1} parent=11 // pred_region
          _
        $region16: #{tpu_custom_call.1} parent=11 // pred_fallthru
          _
        // Predicated region
        $region17: #{tpu_custom_call.1} parent=11 // pred_check
          %p168 = pneg %p82
        $region18: #{tpu_custom_call.1} parent=11 // pred_check_branch
          %170 = sbr.rel (%p168) target = $region20
        $region19: #{tpu_custom_call.1} parent=11 // pred_region
          _
        $region20: #{tpu_custom_call.1} parent=11 // pred_fallthru
          _
        // Predicated region
        $region21: #{tpu_custom_call.1} parent=11 // pred_check
          %p171 = pneg %p103
        $region22: #{tpu_custom_call.1} parent=11 // pred_check_branch
          %173 = sbr.rel (%p171) target = $region24
        $region23: #{tpu_custom_call.1} parent=11 // pred_region
          _
        $region24: #{tpu_custom_call.1} parent=11 // pred_fallthru
          _
        // Predicated region
        $region25: #{tpu_custom_call.1} parent=11 // pred_check
          %p174 = pneg %p124
        $region26: #{tpu_custom_call.1} parent=11 // pred_check_branch
          %176 = sbr.rel (%p174) target = $region28
        $region27: #{tpu_custom_call.1} parent=11 // pred_region
          _
        $region28: #{tpu_custom_call.1} parent=11 // pred_fallthru
          _
      $region12: #{tpu_custom_call.1} parent=5 // pred_fallthru
        _
      %p177 = scmp.lt.s32.totalorder %s14, 2
      // Predicated region
      $region29: #{tpu_custom_call.1} parent=5 // pred_check
        %p178 = pneg %p177
      $region30: #{tpu_custom_call.1} parent=5 // pred_check_branch
        %180 = sbr.rel (%p178) target = $region32
      $region31: #{tpu_custom_call.1} parent=5 // pred_region
        // Predicated region
        $region33: #{tpu_custom_call.1} parent=31 // pred_check
          %p181 = pneg %p34
        $region34: #{tpu_custom_call.1} parent=31 // pred_check_branch
          %183 = sbr.rel (%p181) target = $region36
        $region35: #{tpu_custom_call.1} parent=31 // pred_region
          %s184 = smul.u32 8, %s14
          %p185 = scmp.lt.s32.totalorder %s184, 15
          %s186 = scalar_select %p185, %s184, 15
          %s187 = smul.addr %s186, 8
          %s188 = scalar_lea.vmem %s0, %s187
          %s189 = smul.u32 8, %s14
        $region36: #{tpu_custom_call.1} parent=31 // pred_fallthru
          _
      $region32: #{tpu_custom_call.1} parent=5 // pred_fallthru
        _
      %p190 = scmp.le.s32.totalorder 1, %s14
      %p191 = scmp.lt.s32.totalorder %s14, 3
      %p192 = pnand %p190, %p191
      %p193 = pneg %p192
      // Predicated region
      $region37: #{tpu_custom_call.1} parent=5 // pred_check
        _
      $region38: #{tpu_custom_call.1} parent=5 // pred_check_branch
        %195 = sbr.rel (%p192) target = $region40
      $region39: #{tpu_custom_call.1} parent=5 // pred_region
        %s196 = ssub.s32 %s14, 1
        %s197 = smul.u32 8, %s19
        %p198 = scmp.lt.s32.totalorder %s197, 15
        %s199 = scalar_select %p198, %s197, 15
        %s200 = smul.addr %s199, 8
        %s201 = scalar_lea.vmem %s0, %s200
        %p202 = pneg %p40
        %p203 = pneg %p37
        %p204 = pneg %p61
        %p205 = pneg %p58
        %p206 = pneg %p82
        %p207 = pneg %p79
        %p208 = pneg %p103
        %p209 = pneg %p100
        %p210 = pneg %p124
        %p211 = pneg %p121
        %p212 = pneg %p150
        %p213 = pneg %p147
        %s214 = sand.u32 %s137, 1
        %s215 = scalar_lea.sflag [#allocation3], %s214
        %s216 = sand.u32 %s137, 1
        %s217 = smul.addr %s216, 128
        %s218 = scalar_lea.vmem [#allocation2], %s217
        %s219 = smul.u32 8, %s19
        %p220 = scmp.lt.s32.totalorder %s219, 15
        %s221 = scalar_select %p220, %s219, 15
        %s222 = smul.addr %s221, 8
        %s223 = scalar_lea.vmem %s0, %s222
        %s224 = smul.u32 8, %s19
        %s225 = smul.u32 8, %s19
        %v226 = vld [vmem:[%s223] sm:$0xff]
        %v227 = vld [vmem:[%s223 + $0x8] sm:$0xff]
        %v228 = vld [vmem:[%s223 + $0x10] sm:$0xff]
        %v229 = vld [vmem:[%s223 + $0x18] sm:$0xff]
        %v230 = vld [vmem:[%s223 + $0x20] sm:$0xff]
        %v231 = vld [vmem:[%s223 + $0x28] sm:$0xff]
        %v232 = vld [vmem:[%s223 + $0x30] sm:$0xff]
        %v233 = vld [vmem:[%s223 + $0x38] sm:$0xff]
        %v234 = vld [vmem:[%s1] sm:$0xff]
        %v235 = vld [vmem:[%s1 + $0x8] sm:$0xff]
        %v236 = vld [vmem:[%s1 + $0x10] sm:$0xff]
        %v237 = vld [vmem:[%s1 + $0x18] sm:$0xff]
        %v238 = vld [vmem:[%s1 + $0x20] sm:$0xff]
        %v239 = vld [vmem:[%s1 + $0x28] sm:$0xff]
        %v240 = vld [vmem:[%s1 + $0x30] sm:$0xff]
        %v241 = vld [vmem:[%s1 + $0x38] sm:$0xff]
        %vm242 = vcmask 523264
        %v244 = vsel %vm242, %v226, 0
        %v247 = vsel %vm242, %v227, 0
        %v250 = vsel %vm242, %v228, 0
        %v253 = vsel %vm242, %v229, 0
        %v256 = vsel %vm242, %v230, 0
        %v259 = vsel %vm242, %v231, 0
        %v262 = vsel %vm242, %v232, 0
        %v265 = vsel %vm242, %v233, 0
        %267 = vmatpush.msra.mxu0 0.0
        %268 = vmatpush.msra.mxu0 0.0
        %269 = vmatpush.msra.mxu0 0.0
        %270 = vmatpush.msra.mxu0 0.0
        %271 = vmatpush.msra.mxu0 0.0
        %272 = vmatpush.msra.mxu0 0.0
        %273 = vmatpush.msra.mxu0 0.0
        %274 = vmatpush.msra.mxu0 0.0
        %275 = vmatpush.msra.mxu0 %v241
        %276 = vmatpush.msra.mxu0 %v240
        %277 = vmatpush.msra.mxu0 %v239
        %278 = vmatpush.msra.mxu0 %v238
        %279 = vmatpush.msra.mxu0 %v237
        %280 = vmatpush.msra.mxu0 %v236
        %281 = vmatpush.msra.mxu0 %v235
        %282 = vmatpush.msra.mxu0 %v234
        %283 = vmatmul.f32.gmra.mxu0 %v244
        %v284 = vpop.f32.mrf.mxu0
        %v285 = vadd.f32 0.0, %v284
        %286 = vmatmul.f32.gmra.mxu0 %v247
        %v287 = vpop.f32.mrf.mxu0
        %v288 = vadd.f32 0.0, %v287
        %289 = vmatmul.f32.gmra.mxu0 %v250
        %v290 = vpop.f32.mrf.mxu0
        %v291 = vadd.f32 0.0, %v290
        %292 = vmatmul.f32.gmra.mxu0 %v253
        %v293 = vpop.f32.mrf.mxu0
        %v294 = vadd.f32 0.0, %v293
        %295 = vmatmul.f32.gmra.mxu0 %v256
        %v296 = vpop.f32.mrf.mxu0
        %v297 = vadd.f32 0.0, %v296
        %298 = vmatmul.f32.gmra.mxu0 %v259
        %v299 = vpop.f32.mrf.mxu0
        %v300 = vadd.f32 0.0, %v299
        %301 = vmatmul.f32.gmra.mxu0 %v262
        %v302 = vpop.f32.mrf.mxu0
        %v303 = vadd.f32 0.0, %v302
        %304 = vmatmul.f32.gmra.mxu0 %v265
        %v305 = vpop.f32.mrf.mxu0
        %v306 = vadd.f32 0.0, %v305
        %307 = vdwg.mxu0
        %v308 = vld [vmem:[%s2] sm:$0xff]
        %v309 = vld [vmem:[%s2 + $0x8] sm:$0xff]
        %v310 = vld [vmem:[%s2 + $0x10] sm:$0xff]
        %v311 = vld [vmem:[%s2 + $0x18] sm:$0xff]
        %v312 = vld [vmem:[%s2 + $0x20] sm:$0xff]
        %v313 = vld [vmem:[%s2 + $0x28] sm:$0xff]
        %v314 = vld [vmem:[%s2 + $0x30] sm:$0xff]
        %v315 = vld [vmem:[%s2 + $0x38] sm:$0xff]
        %v316 = vld [vmem:[%s2 + $0x40] sm:$0xff]
        %v317 = vld [vmem:[%s2 + $0x48] sm:$0xff]
        %v318 = vld [vmem:[%s2 + $0x50] sm:$0xff]
        %v319 = vld [vmem:[%s2 + $0x58] sm:$0xff]
        %v320 = vld [vmem:[%s2 + $0x60] sm:$0xff]
        %v321 = vld [vmem:[%s2 + $0x68] sm:$0xff]
        %v322 = vld [vmem:[%s2 + $0x70] sm:$0xff]
        %v323 = vld [vmem:[%s2 + $0x78] sm:$0xff]
        %324 = vmatpush.msra.mxu0 %v323
        %325 = vmatpush.msra.mxu0 %v322
        %326 = vmatpush.msra.mxu0 %v321
        %327 = vmatpush.msra.mxu0 %v320
        %328 = vmatpush.msra.mxu0 %v319
        %329 = vmatpush.msra.mxu0 %v318
        %330 = vmatpush.msra.mxu0 %v317
        %331 = vmatpush.msra.mxu0 %v316
        %332 = vmatpush.msra.mxu0 %v315
        %333 = vmatpush.msra.mxu0 %v314
        %334 = vmatpush.msra.mxu0 %v313
        %335 = vmatpush.msra.mxu0 %v312
        %336 = vmatpush.msra.mxu0 %v311
        %337 = vmatpush.msra.mxu0 %v310
        %338 = vmatpush.msra.mxu0 %v309
        %339 = vmatpush.msra.mxu0 %v308
        %340 = vmatmul.f32.gmra.mxu0 %v285
        %v341 = vpop.f32.mrf.mxu0
        %v342 = vadd.f32 0.0, %v341
        %343 = vmatmul.f32.gmra.mxu0 %v288
        %v344 = vpop.f32.mrf.mxu0
        %v345 = vadd.f32 0.0, %v344
        %346 = vmatmul.f32.gmra.mxu0 %v291
        %v347 = vpop.f32.mrf.mxu0
        %v348 = vadd.f32 0.0, %v347
        %349 = vmatmul.f32.gmra.mxu0 %v294
        %v350 = vpop.f32.mrf.mxu0
        %v351 = vadd.f32 0.0, %v350
        %352 = vmatmul.f32.gmra.mxu0 %v297
        %v353 = vpop.f32.mrf.mxu0
        %v354 = vadd.f32 0.0, %v353
        %355 = vmatmul.f32.gmra.mxu0 %v300
        %v356 = vpop.f32.mrf.mxu0
        %v357 = vadd.f32 0.0, %v356
        %358 = vmatmul.f32.gmra.mxu0 %v303
        %v359 = vpop.f32.mrf.mxu0
        %v360 = vadd.f32 0.0, %v359
        %361 = vmatmul.f32.gmra.mxu0 %v306
        %v362 = vpop.f32.mrf.mxu0
        %v363 = vadd.f32 0.0, %v362
        %364 = vdwg.mxu0
        %v365 = vmul.f32 %v285, %v285
        %v366 = vmul.f32 %v288, %v288
        %v367 = vmul.f32 %v291, %v291
        %v368 = vmul.f32 %v294, %v294
        %v369 = vmul.f32 %v297, %v297
        %v370 = vmul.f32 %v300, %v300
        %v371 = vmul.f32 %v303, %v303
        %v372 = vmul.f32 %v306, %v306
        %373 = vmatpush.msra.mxu0 %v323
        %374 = vmatpush.msra.mxu0 %v322
        %375 = vmatpush.msra.mxu0 %v321
        %376 = vmatpush.msra.mxu0 %v320
        %377 = vmatpush.msra.mxu0 %v319
        %378 = vmatpush.msra.mxu0 %v318
        %379 = vmatpush.msra.mxu0 %v317
        %380 = vmatpush.msra.mxu0 %v316
        %381 = vmatpush.msra.mxu0 %v315
        %382 = vmatpush.msra.mxu0 %v314
        %383 = vmatpush.msra.mxu0 %v313
        %384 = vmatpush.msra.mxu0 %v312
        %385 = vmatpush.msra.mxu0 %v311
        %386 = vmatpush.msra.mxu0 %v310
        %387 = vmatpush.msra.mxu0 %v309
        %388 = vmatpush.msra.mxu0 %v308
        %389 = vmatmul.f32.gmra.mxu0 %v365
        %v390 = vpop.f32.mrf.mxu0
        %v391 = vadd.f32 0.0, %v390
        %392 = vmatmul.f32.gmra.mxu0 %v366
        %v393 = vpop.f32.mrf.mxu0
        %v394 = vadd.f32 0.0, %v393
        %395 = vmatmul.f32.gmra.mxu0 %v367
        %v396 = vpop.f32.mrf.mxu0
        %v397 = vadd.f32 0.0, %v396
        %398 = vmatmul.f32.gmra.mxu0 %v368
        %v399 = vpop.f32.mrf.mxu0
        %v400 = vadd.f32 0.0, %v399
        %401 = vmatmul.f32.gmra.mxu0 %v369
        %v402 = vpop.f32.mrf.mxu0
        %v403 = vadd.f32 0.0, %v402
        %404 = vmatmul.f32.gmra.mxu0 %v370
        %v405 = vpop.f32.mrf.mxu0
        %v406 = vadd.f32 0.0, %v405
        %407 = vmatmul.f32.gmra.mxu0 %v371
        %v408 = vpop.f32.mrf.mxu0
        %v409 = vadd.f32 0.0, %v408
        %410 = vmatmul.f32.gmra.mxu0 %v372
        %v411 = vpop.f32.mrf.mxu0
        %v412 = vadd.f32 0.0, %v411
        %413 = vdwg.mxu0
        %v414 = vmul.f32 %v342, 0.03125
        %v415 = vmul.f32 %v345, 0.03125
        %v416 = vmul.f32 %v348, 0.03125
        %v417 = vmul.f32 %v351, 0.03125
        %v418 = vmul.f32 %v354, 0.03125
        %v419 = vmul.f32 %v357, 0.03125
        %v420 = vmul.f32 %v360, 0.03125
        %v421 = vmul.f32 %v363, 0.03125
        %v422 = vmul.f32 %v391, 0.03125
        %v423 = vmul.f32 %v394, 0.03125
        %v424 = vmul.f32 %v397, 0.03125
        %v425 = vmul.f32 %v400, 0.03125
        %v426 = vmul.f32 %v403, 0.03125
        %v427 = vmul.f32 %v406, 0.03125
        %v428 = vmul.f32 %v409, 0.03125
        %v429 = vmul.f32 %v412, 0.03125
        %v430 = vmul.f32 %v414, %v414
        %v431 = vmul.f32 %v415, %v415
        %v432 = vmul.f32 %v416, %v416
        %v433 = vmul.f32 %v417, %v417
        %v434 = vmul.f32 %v418, %v418
        %v435 = vmul.f32 %v419, %v419
        %v436 = vmul.f32 %v420, %v420
        %v437 = vmul.f32 %v421, %v421
        %v438 = vsub.f32 %v422, %v430
        %v439 = vsub.f32 %v423, %v431
        %v440 = vsub.f32 %v424, %v432
        %v441 = vsub.f32 %v425, %v433
        %v442 = vsub.f32 %v426, %v434
        %v443 = vsub.f32 %v427, %v435
        %v444 = vsub.f32 %v428, %v436
        %v445 = vsub.f32 %v429, %v437
        %v446 = vadd.f32 %v438, 1e-05
        %v447 = vadd.f32 %v439, 1e-05
        %v448 = vadd.f32 %v440, 1e-05
        %v449 = vadd.f32 %v441, 1e-05
        %v450 = vadd.f32 %v442, 1e-05
        %v451 = vadd.f32 %v443, 1e-05
        %v452 = vadd.f32 %v444, 1e-05
        %v453 = vadd.f32 %v445, 1e-05
        %v454 = vrsqrt.pop %v446
        %v455 = vmul.f32 %v454, %v446
        %v456 = vmul.f32 %v455, %v454
        %v457 = vmul.f32 0.5, %v456
        %v458 = vsub.f32 1.5, %v457
        %v459 = vmul.f32 %v454, %v458
        %vm460 = vweird.f32 %v446
        %vm461 = vweird.f32 %v454
        %vm462 = vmor %vm460, %vm461
        %v463 = vsel %vm462, %v454, %v459
        %v464 = vrsqrt.pop %v447
        %v465 = vmul.f32 %v464, %v447
        %v466 = vmul.f32 %v465, %v464
        %v467 = vmul.f32 0.5, %v466
        %v468 = vsub.f32 1.5, %v467
        %v469 = vmul.f32 %v464, %v468
        %vm470 = vweird.f32 %v447
        %vm471 = vweird.f32 %v464
        %vm472 = vmor %vm470, %vm471
        %v473 = vsel %vm472, %v464, %v469
        %v474 = vrsqrt.pop %v448
        %v475 = vmul.f32 %v474, %v448
        %v476 = vmul.f32 %v475, %v474
        %v477 = vmul.f32 0.5, %v476
        %v478 = vsub.f32 1.5, %v477
        %v479 = vmul.f32 %v474, %v478
        %vm480 = vweird.f32 %v448
        %vm481 = vweird.f32 %v474
        %vm482 = vmor %vm480, %vm481
        %v483 = vsel %vm482, %v474, %v479
        %v484 = vrsqrt.pop %v449
        %v485 = vmul.f32 %v484, %v449
        %v486 = vmul.f32 %v485, %v484
        %v487 = vmul.f32 0.5, %v486
        %v488 = vsub.f32 1.5, %v487
        %v489 = vmul.f32 %v484, %v488
        %vm490 = vweird.f32 %v449
        %vm491 = vweird.f32 %v484
        %vm492 = vmor %vm490, %vm491
        %v493 = vsel %vm492, %v484, %v489
        %v494 = vrsqrt.pop %v450
        %v495 = vmul.f32 %v494, %v450
        %v496 = vmul.f32 %v495, %v494
        %v497 = vmul.f32 0.5, %v496
        %v498 = vsub.f32 1.5, %v497
        %v499 = vmul.f32 %v494, %v498
        %vm500 = vweird.f32 %v450
        %vm501 = vweird.f32 %v494
        %vm502 = vmor %vm500, %vm501
        %v503 = vsel %vm502, %v494, %v499
        %v504 = vrsqrt.pop %v451
        %v505 = vmul.f32 %v504, %v451
        %v506 = vmul.f32 %v505, %v504
        %v507 = vmul.f32 0.5, %v506
        %v508 = vsub.f32 1.5, %v507
        %v509 = vmul.f32 %v504, %v508
        %vm510 = vweird.f32 %v451
        %vm511 = vweird.f32 %v504
        %vm512 = vmor %vm510, %vm511
        %v513 = vsel %vm512, %v504, %v509
        %v514 = vrsqrt.pop %v452
        %v515 = vmul.f32 %v514, %v452
        %v516 = vmul.f32 %v515, %v514
        %v517 = vmul.f32 0.5, %v516
        %v518 = vsub.f32 1.5, %v517
        %v519 = vmul.f32 %v514, %v518
        %vm520 = vweird.f32 %v452
        %vm521 = vweird.f32 %v514
        %vm522 = vmor %vm520, %vm521
        %v523 = vsel %vm522, %v514, %v519
        %v524 = vrsqrt.pop %v453
        %v525 = vmul.f32 %v524, %v453
        %v526 = vmul.f32 %v525, %v524
        %v527 = vmul.f32 0.5, %v526
        %v528 = vsub.f32 1.5, %v527
        %v529 = vmul.f32 %v524, %v528
        %vm530 = vweird.f32 %v453
        %vm531 = vweird.f32 %v524
        %vm532 = vmor %vm530, %vm531
        %v533 = vsel %vm532, %v524, %v529
        %v534 = vld [vmem:[%s3] sm:$0xf]
        %vm535 = vcmask 31744
        %v537 = vsel %vm535, %v463, 0
        %v540 = vsel %vm535, %v473, 0
        %v543 = vsel %vm535, %v483, 0
        %v546 = vsel %vm535, %v493, 0
        %v549 = vsel %vm535, %v503, 0
        %v552 = vsel %vm535, %v513, 0
        %v555 = vsel %vm535, %v523, 0
        %v558 = vsel %vm535, %v533, 0
        %vm560 = vcmask 1043456
        %v562 = vsel %vm560, %v534, 0
        %564 = vmatpush.msra.mxu0 0.0
        %565 = vmatpush.msra.mxu0 0.0
        %566 = vmatpush.msra.mxu0 0.0
        %567 = vmatpush.msra.mxu0 0.0
        %568 = vmatpush.msra.mxu0 0.0
        %569 = vmatpush.msra.mxu0 0.0
        %570 = vmatpush.msra.mxu0 0.0
        %571 = vmatpush.msra.mxu0 0.0
        %572 = vmatpush.msra.mxu0 0.0
        %573 = vmatpush.msra.mxu0 0.0
        %574 = vmatpush.msra.mxu0 0.0
        %575 = vmatpush.msra.mxu0 0.0
        %576 = vmatpush.msra.mxu0 0.0
        %577 = vmatpush.msra.mxu0 0.0
        %578 = vmatpush.msra.mxu0 0.0
        %579 = vmatpush.msra.mxu0 %v562
        %580 = vmatmul.f32.gmra.mxu0 %v537
        %v581 = vpop.f32.mrf.mxu0
        %v582 = vadd.f32 0.0, %v581
        %583 = vmatmul.f32.gmra.mxu0 %v540
        %v584 = vpop.f32.mrf.mxu0
        %v585 = vadd.f32 0.0, %v584
        %586 = vmatmul.f32.gmra.mxu0 %v543
        %v587 = vpop.f32.mrf.mxu0
        %v588 = vadd.f32 0.0, %v587
        %589 = vmatmul.f32.gmra.mxu0 %v546
        %v590 = vpop.f32.mrf.mxu0
        %v591 = vadd.f32 0.0, %v590
        %592 = vmatmul.f32.gmra.mxu0 %v549
        %v593 = vpop.f32.mrf.mxu0
        %v594 = vadd.f32 0.0, %v593
        %595 = vmatmul.f32.gmra.mxu0 %v552
        %v596 = vpop.f32.mrf.mxu0
        %v597 = vadd.f32 0.0, %v596
        %598 = vmatmul.f32.gmra.mxu0 %v555
        %v599 = vpop.f32.mrf.mxu0
        %v600 = vadd.f32 0.0, %v599
        %601 = vmatmul.f32.gmra.mxu0 %v558
        %v602 = vpop.f32.mrf.mxu0
        %v603 = vadd.f32 0.0, %v602
        %604 = vdwg.mxu0
        %v605 = vmul.f32 %v414, %v463
        %v606 = vmul.f32 %v415, %v473
        %v607 = vmul.f32 %v416, %v483
        %v608 = vmul.f32 %v417, %v493
        %v609 = vmul.f32 %v418, %v503
        %v610 = vmul.f32 %v419, %v513
        %v611 = vmul.f32 %v420, %v523
        %v612 = vmul.f32 %v421, %v533
        %v614 = vsel %vm535, %v605, 0
        %v617 = vsel %vm535, %v606, 0
        %v620 = vsel %vm535, %v607, 0
        %v623 = vsel %vm535, %v608, 0
        %v626 = vsel %vm535, %v609, 0
        %v629 = vsel %vm535, %v610, 0
        %v632 = vsel %vm535, %v611, 0
        %v635 = vsel %vm535, %v612, 0
        %637 = vmatpush.msra.mxu0 0.0
        %638 = vmatpush.msra.mxu0 0.0
        %639 = vmatpush.msra.mxu0 0.0
        %640 = vmatpush.msra.mxu0 0.0
        %641 = vmatpush.msra.mxu0 0.0
        %642 = vmatpush.msra.mxu0 0.0
        %643 = vmatpush.msra.mxu0 0.0
        %644 = vmatpush.msra.mxu0 0.0
        %645 = vmatpush.msra.mxu0 0.0
        %646 = vmatpush.msra.mxu0 0.0
        %647 = vmatpush.msra.mxu0 0.0
        %648 = vmatpush.msra.mxu0 0.0
        %649 = vmatpush.msra.mxu0 0.0
        %650 = vmatpush.msra.mxu0 0.0
        %651 = vmatpush.msra.mxu0 0.0
        %652 = vmatpush.msra.mxu0 %v562
        %653 = vmatmul.f32.gmra.mxu0 %v614
        %v654 = vpop.f32.mrf.mxu0
        %v655 = vadd.f32 0.0, %v654
        %656 = vmatmul.f32.gmra.mxu0 %v617
        %v657 = vpop.f32.mrf.mxu0
        %v658 = vadd.f32 0.0, %v657
        %659 = vmatmul.f32.gmra.mxu0 %v620
        %v660 = vpop.f32.mrf.mxu0
        %v661 = vadd.f32 0.0, %v660
        %662 = vmatmul.f32.gmra.mxu0 %v623
        %v663 = vpop.f32.mrf.mxu0
        %v664 = vadd.f32 0.0, %v663
        %665 = vmatmul.f32.gmra.mxu0 %v626
        %v666 = vpop.f32.mrf.mxu0
        %v667 = vadd.f32 0.0, %v666
        %668 = vmatmul.f32.gmra.mxu0 %v629
        %v669 = vpop.f32.mrf.mxu0
        %v670 = vadd.f32 0.0, %v669
        %671 = vmatmul.f32.gmra.mxu0 %v632
        %v672 = vpop.f32.mrf.mxu0
        %v673 = vadd.f32 0.0, %v672
        %674 = vmatmul.f32.gmra.mxu0 %v635
        %v675 = vpop.f32.mrf.mxu0
        %v676 = vadd.f32 0.0, %v675
        %677 = vdwg.mxu0
        %v678 = vmul.f32 %v285, %v582
        %v679 = vmul.f32 %v288, %v585
        %v680 = vmul.f32 %v291, %v588
        %v681 = vmul.f32 %v294, %v591
        %v682 = vmul.f32 %v297, %v594
        %v683 = vmul.f32 %v300, %v597
        %v684 = vmul.f32 %v303, %v600
        %v685 = vmul.f32 %v306, %v603
        %v686 = vsub.f32 %v678, %v655
        %v687 = vsub.f32 %v679, %v658
        %v688 = vsub.f32 %v680, %v661
        %v689 = vsub.f32 %v681, %v664
        %v690 = vsub.f32 %v682, %v667
        %v691 = vsub.f32 %v683, %v670
        %v692 = vsub.f32 %v684, %v673
        %v693 = vsub.f32 %v685, %v676
        %v694 = vld [vmem:[%s4] sm:$0x1]
        %v696 = vperm.slane %v694, 0
        %v698 = vadd.f32 %v686, %v696
        %v699 = vadd.f32 %v687, %v696
        %v700 = vadd.f32 %v688, %v696
        %v701 = vadd.f32 %v689, %v696
        %v702 = vadd.f32 %v690, %v696
        %v703 = vadd.f32 %v691, %v696
        %v704 = vadd.f32 %v692, %v696
        %v705 = vadd.f32 %v693, %v696
        %706 = vst.msk [vmem:[%s218] sm:$0xff] %vm242, %v698
        %707 = vst.msk [vmem:[%s218 + $0x10] sm:$0xff] %vm242, %v699
        %708 = vst.msk [vmem:[%s218 + $0x20] sm:$0xff] %vm242, %v700
        %709 = vst.msk [vmem:[%s218 + $0x30] sm:$0xff] %vm242, %v701
        %710 = vst.msk [vmem:[%s218 + $0x40] sm:$0xff] %vm242, %v702
        %711 = vst.msk [vmem:[%s218 + $0x50] sm:$0xff] %vm242, %v703
        %712 = vst.msk [vmem:[%s218 + $0x60] sm:$0xff] %vm242, %v704
        %713 = vst.msk [vmem:[%s218 + $0x70] sm:$0xff] %vm242, %v705
        %722 = vrot.lane.b32.xlu0 %v698, 64
        %v723 = vpop.permute.xlu0 %722
        %724 = vrot.lane.b32.xlu0 %v699, 64
        %v725 = vpop.permute.xlu0 %724
        %726 = vrot.lane.b32.xlu0 %v700, 64
        %v727 = vpop.permute.xlu0 %726
        %728 = vrot.lane.b32.xlu0 %v701, 64
        %v729 = vpop.permute.xlu0 %728
        %730 = vrot.lane.b32.xlu0 %v702, 64
        %v731 = vpop.permute.xlu0 %730
        %732 = vrot.lane.b32.xlu0 %v703, 64
        %v733 = vpop.permute.xlu0 %732
        %734 = vrot.lane.b32.xlu0 %v704, 64
        %v735 = vpop.permute.xlu0 %734
        %736 = vrot.lane.b32.xlu0 %v705, 64
        %v737 = vpop.permute.xlu0 %736
        %s746 = scalar_lea.vmem %s218, 8 [#allocation2]
        %747 = vst.msk [vmem:[%s746] sm:$0xff] %vm242, %v723
        %748 = vst.msk [vmem:[%s746 + $0x10] sm:$0xff] %vm242, %v725
        %749 = vst.msk [vmem:[%s746 + $0x20] sm:$0xff] %vm242, %v727
        %750 = vst.msk [vmem:[%s746 + $0x30] sm:$0xff] %vm242, %v729
        %751 = vst.msk [vmem:[%s746 + $0x40] sm:$0xff] %vm242, %v731
        %752 = vst.msk [vmem:[%s746 + $0x50] sm:$0xff] %vm242, %v733
        %753 = vst.msk [vmem:[%s746 + $0x60] sm:$0xff] %vm242, %v735
        %754 = vst.msk [vmem:[%s746 + $0x70] sm:$0xff] %vm242, %v737
        %s755 = sand.u32 %s137, 1
        %s756 = scalar_lea.sflag [#allocation3], %s755
        %s757 = sand.u32 %s137, 1
        %s758 = smul.addr %s757, 128
        %s759 = scalar_lea.vmem [#allocation2], %s758
        // Predicated region
        $region41: #{tpu_custom_call.1} parent=39 // pred_check
          %p760 = pneg %p147
        $region42: #{tpu_custom_call.1} parent=39 // pred_check_branch
          %762 = sbr.rel (%p760) target = $region44
        $region43: #{tpu_custom_call.1} parent=39 // pred_region
          %s763 = smul.u32 8, %s19
          %765 = vsyncadd %s756, 0
          %s766 = smul.addr %s763, 2
          %s767 = smul.addr %s766, 8
          %s768 = scalar_lea.hbm %s5, %s767
          %s769 = sshll.u32 %s759, 4
          %s770 = int_to_ptr.vmem [resolvable:$true] %s769
          %s771 = sshll.u32 %s768, 4
          %s772 = int_to_ptr.hbm [resolvable:$true] %s771
          %777 = dma.vmem_to_hbm [thread:$0]  %s770, 2048, %s772, %s756, 128, 128, 8
        $region44: #{tpu_custom_call.1} parent=39 // pred_fallthru
          _
      $region40: #{tpu_custom_call.1} parent=5 // pred_fallthru
        _
      %p778 = scmp.le.s32.totalorder 2, %s14
      // Predicated region
      $region45: #{tpu_custom_call.1} parent=5 // pred_check
        %p779 = pneg %p778
      $region46: #{tpu_custom_call.1} parent=5 // pred_check_branch
        %781 = sbr.rel (%p779) target = $region48
      $region47: #{tpu_custom_call.1} parent=5 // pred_region
        %s782 = ssub.s32 %s14, 2
        // Predicated region
        $region49: #{tpu_custom_call.1} parent=47 // pred_check
          %p783 = pneg %p153
        $region50: #{tpu_custom_call.1} parent=47 // pred_check_branch
          %785 = sbr.rel (%p783) target = $region52
        $region51: #{tpu_custom_call.1} parent=47 // pred_region
          %s786 = sand.u32 %s138, 1
          %s787 = scalar_lea.sflag [#allocation3], %s786
          %s788 = sand.u32 %s138, 1
          %s789 = smul.addr %s788, 128
          %s790 = scalar_lea.vmem [#allocation2], %s789
          %792 = dma.done %s787, 2048
        $region52: #{tpu_custom_call.1} parent=47 // pred_fallthru
          _
      $region48: #{tpu_custom_call.1} parent=5 // pred_fallthru
        _
    $region6: #{tpu_custom_call.1} parent=1 // loop_footer
      %s18 = sadd.s32 1, %s14
    $region7: #{tpu_custom_call.1} parent=1 // loop_footer_branch
      %13 = sbr.rel target = $region3
    $region8: #{tpu_custom_call.1} parent=1 // loop_exit
      _
    %793 = vsyncpa [#allocation3], 1
    %s794 = scalar_lea.sflag [#allocation3], 1
    %795 = vsyncpa %s794, 1

</llo_original>
